<compile_context>
chip_gen: v6e
topology: v6e:2x2x1
jax: 0.10.0
libtpu: 0.0.40
codegen_flags: <defaults>
</compile_context>

<pallas_src>
import functools

import jax
import jax.numpy as jnp
from jax.experimental import pallas as pl
from jax.experimental.pallas import tpu as pltpu


def _odeg_fused_kernel(x_ref, adj_ref, m_ref, o_ref):
    # x_ref  : (B*N, T*F)  all batches stacked along the matmul M dimension
    # adj_ref: (B*N, B*N)  block-diag kron(I_B, 0.5*time*sigmoid(alpha)*adj)
    # m_ref  : (T*F, T*F)  time*(feature mix + temporal mix) + (1-2*time)*I
    # o_ref  : (B*N, T*F)
    x = x_ref[...]
    agg = jnp.dot(adj_ref[...], x, preferred_element_type=jnp.float32)   # node aggregation
    mix = jnp.dot(x, m_ref[...], preferred_element_type=jnp.float32)     # mixes + residual
    o_ref[...] = jnp.maximum(agg + mix, 0.0)                             # F.relu


def _odeg_batched_kernel(x_ref, adj_ref, m_ref, o_ref):
    # Fallback for large B: one batch per grid step.
    x = x_ref[0]                                                          # (N, T*F)
    agg = jnp.dot(adj_ref[...], x, preferred_element_type=jnp.float32)
    mix = jnp.dot(x, m_ref[...], preferred_element_type=jnp.float32)
    o_ref[0] = jnp.maximum(agg + mix, 0.0)


@functools.partial(jax.jit, static_argnames=("time",))
def odeg_forward(x, adj, alpha_p, w_p, d_p, w2_p, d2_p, *, time):
    B, N, T, F = x.shape
    TF = T * F
    BN = B * N
    dt = jnp.float32
    t = float(time)  # NOTE: `time` is static -> changing it recompiles (module constant)

    # --- tiny parameter preprocessing (fused by XLA next to the pallas_call) ---
    alpha = jax.nn.sigmoid(alpha_p.astype(dt))                           # (N,)
    adj_scaled = ((0.5 * t) * alpha)[:, None] * adj.astype(dt)           # (N, N), rows scaled
    d = jnp.clip(d_p.astype(dt), 0.0, 1.0)
    w_eff = (w_p.astype(dt) * d) @ w_p.astype(dt).T                      # (F, F)
    d2 = jnp.clip(d2_p.astype(dt), 0.0, 1.0)
    w2_eff = (w2_p.astype(dt) * d2) @ w2_p.astype(dt).T                  # (T, T)
    # Combined mixing operator on the flattened (T*F) axis, residual folded in:
    #   x_flat @ kron(I_T, w_eff)  == einsum('ntf,fg->ntg', x, w_eff)   (feature mix)
    #   x_flat @ kron(w2_eff, I_F) == einsum('ntf,tm->nmf', x, w2_eff)  (temporal mix)
    #   + (1-2*time)*I             == the (1-2*time)*x residual term
    m_comb = (t * (jnp.kron(jnp.eye(T, dtype=dt), w_eff)
                   + jnp.kron(w2_eff, jnp.eye(F, dtype=dt)))
              + (1.0 - 2.0 * t) * jnp.eye(TF, dtype=dt))                 # (TF, TF)

    if BN <= 512:
        # --- single-program path: batch folded into the matmul M dimension ---
        x_flat = x.reshape(BN, TF).astype(dt)
        adj_bd = jnp.kron(jnp.eye(B, dtype=dt), adj_scaled)              # (BN, BN) block-diag
        flops = 2 * BN * BN * TF + 2 * BN * TF * TF + 2 * BN * TF
        bytes_acc = 4 * (2 * BN * TF + BN * BN + TF * TF)
        out_flat = pl.pallas_call(
            _odeg_fused_kernel,
            out_shape=jax.ShapeDtypeStruct((BN, TF), dt),
            in_specs=[pl.BlockSpec(memory_space=pltpu.MemorySpace.VMEM)] * 3,
            out_specs=pl.BlockSpec(memory_space=pltpu.MemorySpace.VMEM),
            cost_estimate=pl.CostEstimate(flops=flops, transcendentals=0,
                                          bytes_accessed=bytes_acc),
        )(x_flat, adj_bd, m_comb)
        return out_flat.reshape(B, N, T, F)

    # --- large-B fallback: grid over batches, megacore-shardable ---
    x_flat = x.reshape(B, N, TF).astype(dt)
    flops = B * (2 * N * N * TF + 2 * N * TF * TF + 2 * N * TF)
    bytes_acc = 4 * (2 * B * N * TF + N * N + TF * TF)
    out_flat = pl.pallas_call(
        _odeg_batched_kernel,
        out_shape=jax.ShapeDtypeStruct((B, N, TF), dt),
        grid=(B,),
        in_specs=[
            pl.BlockSpec((1, N, TF), lambda b: (b, 0, 0)),
            # grid-invariant operands: single-buffered (nothing to pipeline)
            pl.BlockSpec((N, N), lambda b: (0, 0), pipeline_mode=pl.Buffered(1)),
            pl.BlockSpec((TF, TF), lambda b: (0, 0), pipeline_mode=pl.Buffered(1)),
        ],
        out_specs=pl.BlockSpec((1, N, TF), lambda b: (b, 0, 0)),
        compiler_params=pltpu.CompilerParams(dimension_semantics=("parallel",)),
        cost_estimate=pl.CostEstimate(flops=flops, transcendentals=0,
                                      bytes_accessed=bytes_acc),
    )(x_flat, adj_scaled, m_comb)
    return out_flat.reshape(B, N, T, F)


def odeg_reference(x, adj, alpha_p, w_p, d_p, w2_p, d2_p, time):
    # Pure-JAX mirror of the PyTorch module (correctness check only).
    alpha = jax.nn.sigmoid(alpha_p)[None, :, None, None]
    xa = jnp.einsum('ij,kjlm->kilm', adj, x)
    d = jnp.clip(d_p, 0.0, 1.0)
    w = (w_p * d) @ w_p.T
    xw = jnp.einsum('ijkl,lm->ijkm', x, w)
    d2 = jnp.clip(d2_p, 0.0, 1.0)
    w2 = (w2_p * d2) @ w2_p.T
    xw2 = jnp.einsum('ijkl,km->ijml', x, w2)
    x0 = x
    f = alpha / 2 * xa - x + xw - x + xw2 - x + x0
    z = x + time * f
    return jax.nn.relu(z)


if __name__ == "__main__":
    # feature_dim=32, temporal_dim=8, num_nodes=16 (adj is N x N), batch=2, time=6
    B, N, T, F = 2, 16, 8, 32
    time = 6.0

    key = jax.random.PRNGKey(0)
    kx, kadj, ka, kw, kd, kw2, kd2 = jax.random.split(key, 7)

    x = jax.random.normal(kx, (B, N, T, F), dtype=jnp.float32)
    adj = jax.random.uniform(kadj, (N, N), dtype=jnp.float32) / N

    # Module init values + small deterministic perturbations so every matmul / clamp
    # is numerically non-trivial.
    alpha_p = 0.8 * jnp.ones((N,), jnp.float32) + 0.1 * jax.random.normal(ka, (N,), jnp.float32)
    w_p = jnp.eye(F, dtype=jnp.float32) + 0.05 * jax.random.normal(kw, (F, F), jnp.float32)
    d_p = jnp.ones((F,), jnp.float32) + 0.5 * jax.random.normal(kd, (F,), jnp.float32)
    w2_p = jnp.eye(T, dtype=jnp.float32) + 0.05 * jax.random.normal(kw2, (T, T), jnp.float32)
    d2_p = jnp.ones((T,), jnp.float32) + 0.5 * jax.random.normal(kd2, (T,), jnp.float32)

    out = odeg_forward(x, adj, alpha_p, w_p, d_p, w2_p, d2_p, time=time)
    out = jax.block_until_ready(out)

    ref = odeg_reference(x, adj, alpha_p, w_p, d_p, w2_p, d2_p, time)
    assert out.shape == x.shape and out.dtype == jnp.float32
    max_err = float(jnp.max(jnp.abs(out - ref)))
    assert jnp.allclose(out, ref, rtol=1e-4, atol=1e-4), f"max abs err = {max_err}"
    print("KERNEL_OK")
</pallas_src>

<mosaic_0001>
module attributes {stable_mosaic.version = 11 : i64} {
  func.func @_odeg_fused_kernel(%arg0: memref<32x256xf32, #tpu.memory_space<vmem>>, %arg1: memref<32x32xf32, #tpu.memory_space<vmem>>, %arg2: memref<256x256xf32, #tpu.memory_space<vmem>>, %arg3: memref<32x256xf32, #tpu.memory_space<vmem>>) attributes {dimension_semantics = [], scalar_prefetch = 0 : i64, scratch_operands = 0 : i64, tpu.core_type = #tpu.core_type<tc>} {
    %c0 = arith.constant 0 : index
    %c0_0 = arith.constant 0 : index
    %0 = vector.load %arg0[%c0, %c0_0] : memref<32x256xf32, #tpu.memory_space<vmem>>, vector<32x256xf32>
    %c0_1 = arith.constant 0 : index
    %c0_2 = arith.constant 0 : index
    %1 = vector.load %arg1[%c0_1, %c0_2] : memref<32x32xf32, #tpu.memory_space<vmem>>, vector<32x32xf32>
    %cst = arith.constant dense<0.000000e+00> : vector<32x256xf32>
    %2 = tpu.matmul %1, %0, %cst {dimension_numbers = #tpu.dot_dimension_numbers<[1], [0], [0], [1], [0, 0, 1, 1], [], []>} : vector<32x32xf32>, vector<32x256xf32>, vector<32x256xf32> -> vector<32x256xf32>
    %c0_3 = arith.constant 0 : index
    %c0_4 = arith.constant 0 : index
    %3 = vector.load %arg2[%c0_3, %c0_4] : memref<256x256xf32, #tpu.memory_space<vmem>>, vector<256x256xf32>
    %cst_5 = arith.constant dense<0.000000e+00> : vector<32x256xf32>
    %4 = tpu.matmul %0, %3, %cst_5 {dimension_numbers = #tpu.dot_dimension_numbers<[1], [0], [0], [1], [0, 0, 1, 1], [], []>} : vector<32x256xf32>, vector<256x256xf32>, vector<32x256xf32> -> vector<32x256xf32>
    %5 = arith.addf %2, %4 : vector<32x256xf32>
    %cst_6 = arith.constant 0.000000e+00 : f32
    %6 = vector.broadcast %cst_6 : f32 to vector<32x256xf32>
    %7 = arith.maximumf %5, %6 : vector<32x256xf32>
    %c0_7 = arith.constant 0 : index
    %c0_8 = arith.constant 0 : index
    %8 = vector.load %arg3[%c0_7, %c0_8] : memref<32x256xf32, #tpu.memory_space<vmem>>, vector<32x256xf32>
    tpu.vector_store %arg3[%c0_7, %c0_8], %7 {strides = array<i32>} : memref<32x256xf32, #tpu.memory_space<vmem>>, vector<32x256xf32>,
    return
  }
}

</mosaic_0001>

<llo_original>
// kernel: odeg_forward.1
$region0: #{odeg_forward.1}
  #allocation0 [shape = 'u32[]', space=smem, size = 0x4, offset = 0x4, fixed_abs, tag = 'smem constant byte address 0x4 - core index']
  #allocation1 [shape = 'u32[144,128]{1,0:T(1,128)}', space=vmem, size = 0x12000, scoped, tag = 'internal scratch']
  %s0 = inlined_call_operand.vmem [shape: f32[32,256], index: 0, kind: input, shape index: {}]
  %s1 = inlined_call_operand.vmem [shape: f32[32,32], index: 1, kind: input, shape index: {}]
  %s2 = inlined_call_operand.vmem [shape: f32[256,256], index: 2, kind: input, shape index: {}]
  %s3 = inlined_call_operand.vmem [shape: f32[32,256], index: 3, kind: output, shape index: {}]
  %s4 = sld [smem:[#allocation0]]
  $region22: #{odeg_forward.1} parent=0
    _
  %s6 = ssub.s32 1, %s4
  %s7 = scalar_select 0, %s6, %s4
  // Predicated region
  $region2: #{odeg_forward.1} parent=0 // pred_check
    _
  $region3: #{odeg_forward.1} parent=0 // pred_check_branch
    %9 = sbr.rel (0) target = $region5
  $region4: #{odeg_forward.1} parent=0 // pred_region
    _
  $region5: #{odeg_forward.1} parent=0 // pred_fallthru
    _
  // Predicated region
  $region6: #{odeg_forward.1} parent=0 // pred_check
    _
  $region7: #{odeg_forward.1} parent=0 // pred_check_branch
    %11 = sbr.rel (0) target = $region9
  $region8: #{odeg_forward.1} parent=0 // pred_region
    _
  $region9: #{odeg_forward.1} parent=0 // pred_fallthru
    _
  // Predicated region
  $region10: #{odeg_forward.1} parent=0 // pred_check
    _
  $region11: #{odeg_forward.1} parent=0 // pred_check_branch
    %13 = sbr.rel (0) target = $region13
  $region12: #{odeg_forward.1} parent=0 // pred_region
    _
  $region13: #{odeg_forward.1} parent=0 // pred_fallthru
    _
  %v14 = vld [vmem:[%s0] sm:$0xff]
  %v15 = vld [vmem:[%s0 + $0x8] sm:$0xff]
  %v16 = vld [vmem:[%s0 + $0x10] sm:$0xff]
  %v17 = vld [vmem:[%s0 + $0x18] sm:$0xff]
  %v18 = vld [vmem:[%s0 + $0x20] sm:$0xff]
  %v19 = vld [vmem:[%s0 + $0x28] sm:$0xff]
  %v20 = vld [vmem:[%s0 + $0x30] sm:$0xff]
  %v21 = vld [vmem:[%s0 + $0x38] sm:$0xff]
  %v22 = vld [vmem:[%s1] sm:$0xff]
  %v23 = vld [vmem:[%s1 + $0x8] sm:$0xff]
  %v24 = vld [vmem:[%s1 + $0x10] sm:$0xff]
  %v25 = vld [vmem:[%s1 + $0x18] sm:$0xff]
  %v26 = vld [vmem:[%s2] sm:$0xff]
  %v27 = vld [vmem:[%s2 + $0x8] sm:$0xff]
  %v28 = vld [vmem:[%s2 + $0x10] sm:$0xff]
  %v29 = vld [vmem:[%s2 + $0x18] sm:$0xff]
  %v30 = vld [vmem:[%s2 + $0x20] sm:$0xff]
  %v31 = vld [vmem:[%s2 + $0x28] sm:$0xff]
  %v32 = vld [vmem:[%s2 + $0x30] sm:$0xff]
  %v33 = vld [vmem:[%s2 + $0x38] sm:$0xff]
  %v34 = vld [vmem:[%s2 + $0x40] sm:$0xff]
  %v35 = vld [vmem:[%s2 + $0x48] sm:$0xff]
  %v36 = vld [vmem:[%s2 + $0x50] sm:$0xff]
  %v37 = vld [vmem:[%s2 + $0x58] sm:$0xff]
  %v38 = vld [vmem:[%s2 + $0x60] sm:$0xff]
  %v39 = vld [vmem:[%s2 + $0x68] sm:$0xff]
  %v40 = vld [vmem:[%s2 + $0x70] sm:$0xff]
  %v41 = vld [vmem:[%s2 + $0x78] sm:$0xff]
  %v42 = vld [vmem:[%s2 + $0x80] sm:$0xff]
  %v43 = vld [vmem:[%s2 + $0x88] sm:$0xff]
  %v44 = vld [vmem:[%s2 + $0x90] sm:$0xff]
  %v45 = vld [vmem:[%s2 + $0x98] sm:$0xff]
  %v46 = vld [vmem:[%s2 + $0xa0] sm:$0xff]
  %v47 = vld [vmem:[%s2 + $0xa8] sm:$0xff]
  %v48 = vld [vmem:[%s2 + $0xb0] sm:$0xff]
  %v49 = vld [vmem:[%s2 + $0xb8] sm:$0xff]
  %v50 = vld [vmem:[%s2 + $0xc0] sm:$0xff]
  %v51 = vld [vmem:[%s2 + $0xc8] sm:$0xff]
  %v52 = vld [vmem:[%s2 + $0xd0] sm:$0xff]
  %v53 = vld [vmem:[%s2 + $0xd8] sm:$0xff]
  %v54 = vld [vmem:[%s2 + $0xe0] sm:$0xff]
  %v55 = vld [vmem:[%s2 + $0xe8] sm:$0xff]
  %v56 = vld [vmem:[%s2 + $0xf0] sm:$0xff]
  %v57 = vld [vmem:[%s2 + $0xf8] sm:$0xff]
  %v58 = vld [vmem:[%s2 + $0x100] sm:$0xff]
  %v59 = vld [vmem:[%s2 + $0x108] sm:$0xff]
  %v60 = vld [vmem:[%s2 + $0x110] sm:$0xff]
  %v61 = vld [vmem:[%s2 + $0x118] sm:$0xff]
  %v62 = vld [vmem:[%s2 + $0x120] sm:$0xff]
  %v63 = vld [vmem:[%s2 + $0x128] sm:$0xff]
  %v64 = vld [vmem:[%s2 + $0x130] sm:$0xff]
  %v65 = vld [vmem:[%s2 + $0x138] sm:$0xff]
  %v66 = vld [vmem:[%s2 + $0x140] sm:$0xff]
  %v67 = vld [vmem:[%s2 + $0x148] sm:$0xff]
  %v68 = vld [vmem:[%s2 + $0x150] sm:$0xff]
  %v69 = vld [vmem:[%s2 + $0x158] sm:$0xff]
  %v70 = vld [vmem:[%s2 + $0x160] sm:$0xff]
  %v71 = vld [vmem:[%s2 + $0x168] sm:$0xff]
  %v72 = vld [vmem:[%s2 + $0x170] sm:$0xff]
  %v73 = vld [vmem:[%s2 + $0x178] sm:$0xff]
  %v74 = vld [vmem:[%s2 + $0x180] sm:$0xff]
  %v75 = vld [vmem:[%s2 + $0x188] sm:$0xff]
  %v76 = vld [vmem:[%s2 + $0x190] sm:$0xff]
  %v77 = vld [vmem:[%s2 + $0x198] sm:$0xff]
  %v78 = vld [vmem:[%s2 + $0x1a0] sm:$0xff]
  %v79 = vld [vmem:[%s2 + $0x1a8] sm:$0xff]
  %v80 = vld [vmem:[%s2 + $0x1b0] sm:$0xff]
  %v81 = vld [vmem:[%s2 + $0x1b8] sm:$0xff]
  %v82 = vld [vmem:[%s2 + $0x1c0] sm:$0xff]
  %v83 = vld [vmem:[%s2 + $0x1c8] sm:$0xff]
  %v84 = vld [vmem:[%s2 + $0x1d0] sm:$0xff]
  %v85 = vld [vmem:[%s2 + $0x1d8] sm:$0xff]
  %v86 = vld [vmem:[%s2 + $0x1e0] sm:$0xff]
  %v87 = vld [vmem:[%s2 + $0x1e8] sm:$0xff]
  %v88 = vld [vmem:[%s2 + $0x1f0] sm:$0xff]
  %v89 = vld [vmem:[%s2 + $0x1f8] sm:$0xff]
  %90 = vmatprep.subr.mxu0 %v57
  %91 = vmatpush1.msra.mxu0 %v56
  %92 = vmatprep.subr.mxu0 %v55
  %93 = vmatpush1.msra.mxu0 %v54
  %94 = vmatprep.subr.mxu0 %v53
  %95 = vmatpush1.msra.mxu0 %v52
  %96 = vmatprep.subr.mxu0 %v51
  %97 = vmatpush1.msra.mxu0 %v50
  %98 = vmatprep.subr.mxu0 %v49
  %99 = vmatpush1.msra.mxu0 %v48
  %100 = vmatprep.subr.mxu0 %v47
  %101 = vmatpush1.msra.mxu0 %v46
  %102 = vmatprep.subr.mxu0 %v45
  %103 = vmatpush1.msra.mxu0 %v44
  %104 = vmatprep.subr.mxu0 %v43
  %105 = vmatpush1.msra.mxu0 %v42
  %106 = vmatprep.subr.mxu0 %v41
  %107 = vmatpush1.msra.mxu0 %v40
  %108 = vmatprep.subr.mxu0 %v39
  %109 = vmatpush1.msra.mxu0 %v38
  %110 = vmatprep.subr.mxu0 %v37
  %111 = vmatpush1.msra.mxu0 %v36
  %112 = vmatprep.subr.mxu0 %v35
  %113 = vmatpush1.msra.mxu0 %v34
  %114 = vmatprep.subr.mxu0 %v33
  %115 = vmatpush1.msra.mxu0 %v32
  %116 = vmatprep.subr.mxu0 %v31
  %117 = vmatpush1.msra.mxu0 %v30
  %118 = vmatprep.subr.mxu0 %v29
  %119 = vmatpush1.msra.mxu0 %v28
  %120 = vmatprep.subr.mxu0 %v27
  %121 = vmatpush1.msra.mxu0 %v26
  %122 = vmatprep.subr.mxu0 %v89
  %123 = vmatpush2.msra.mxu0 %v88
  %124 = vmatprep.subr.mxu0 %v87
  %125 = vmatpush2.msra.mxu0 %v86
  %126 = vmatprep.subr.mxu0 %v85
  %127 = vmatpush2.msra.mxu0 %v84
  %128 = vmatprep.subr.mxu0 %v83
  %129 = vmatpush2.msra.mxu0 %v82
  %130 = vmatprep.subr.mxu0 %v81
  %131 = vmatpush2.msra.mxu0 %v80
  %132 = vmatprep.subr.mxu0 %v79
  %133 = vmatpush2.msra.mxu0 %v78
  %134 = vmatprep.subr.mxu0 %v77
  %135 = vmatpush2.msra.mxu0 %v76
  %136 = vmatprep.subr.mxu0 %v75
  %137 = vmatpush2.msra.mxu0 %v74
  %138 = vmatprep.subr.mxu0 %v73
  %139 = vmatpush2.msra.mxu0 %v72
  %140 = vmatprep.subr.mxu0 %v71
  %141 = vmatpush2.msra.mxu0 %v70
  %142 = vmatprep.subr.mxu0 %v69
  %143 = vmatpush2.msra.mxu0 %v68
  %144 = vmatprep.subr.mxu0 %v67
  %145 = vmatpush2.msra.mxu0 %v66
  %146 = vmatprep.subr.mxu0 %v65
  %147 = vmatpush2.msra.mxu0 %v64
  %148 = vmatprep.subr.mxu0 %v63
  %149 = vmatpush2.msra.mxu0 %v62
  %150 = vmatprep.subr.mxu0 %v61
  %151 = vmatpush2.msra.mxu0 %v60
  %152 = vmatprep.subr.mxu0 %v59
  %153 = vmatpush2.msra.mxu0 %v58
  %154 = vmatprep.mubr.f32.mxu0 %v15
  %155 = vmatmul.mubr.f32.gmra.mxu0 %v14
  %v156 = vpop.f32.mrf.mxu0
  %v157 = vadd.f32 0.0, %v156
  %v158 = vpop.f32.mrf.mxu0
  %v159 = vadd.f32 0.0, %v158
  %160 = vmatprep.mubr.f32.mxu0 %v17
  %161 = vmatmul.mubr.f32.gmra.mxu0 %v16
  %v162 = vpop.f32.mrf.mxu0
  %v163 = vadd.f32 0.0, %v162
  %v164 = vpop.f32.mrf.mxu0
  %v165 = vadd.f32 0.0, %v164
  %166 = vmatprep.mubr.f32.mxu0 %v19
  %167 = vmatmul.mubr.f32.gmra.mxu0 %v18
  %v168 = vpop.f32.mrf.mxu0
  %v169 = vadd.f32 0.0, %v168
  %v170 = vpop.f32.mrf.mxu0
  %v171 = vadd.f32 0.0, %v170
  %172 = vmatprep.mubr.f32.mxu0 %v21
  %173 = vmatmul.mubr.f32.gmra.mxu0 %v20
  %v174 = vpop.f32.mrf.mxu0
  %v175 = vadd.f32 0.0, %v174
  %v176 = vpop.f32.mrf.mxu0
  %v177 = vadd.f32 0.0, %v176
  %178 = vdwg.mxu0
  %vm179 = vcmask 261120
  %v181 = vsel %vm179, %v22, 0
  %v184 = vsel %vm179, %v23, 0
  %v187 = vsel %vm179, %v24, 0
  %v190 = vsel %vm179, %v25, 0
  %192 = vmatprep.subr.mxu0 0.0
  %193 = vmatpush1.msra.mxu0 0.0
  %194 = vmatprep.subr.mxu0 0.0
  %195 = vmatpush1.msra.mxu0 0.0
  %196 = vmatprep.subr.mxu0 0.0
  %197 = vmatpush1.msra.mxu0 0.0
  %198 = vmatprep.subr.mxu0 0.0
  %199 = vmatpush1.msra.mxu0 0.0
  %200 = vmatprep.subr.mxu0 0.0
  %201 = vmatpush1.msra.mxu0 0.0
  %202 = vmatprep.subr.mxu0 0.0
  %203 = vmatpush1.msra.mxu0 0.0
  %204 = vmatprep.subr.mxu0 0.0
  %205 = vmatpush1.msra.mxu0 0.0
  %206 = vmatprep.subr.mxu0 0.0
  %207 = vmatpush1.msra.mxu0 0.0
  %208 = vmatprep.subr.mxu0 0.0
  %209 = vmatpush1.msra.mxu0 0.0
  %210 = vmatprep.subr.mxu0 0.0
  %211 = vmatpush1.msra.mxu0 0.0
  %212 = vmatprep.subr.mxu0 0.0
  %213 = vmatpush1.msra.mxu0 0.0
  %214 = vmatprep.subr.mxu0 0.0
  %215 = vmatpush1.msra.mxu0 0.0
  %216 = vmatprep.subr.mxu0 %v21
  %217 = vmatpush1.msra.mxu0 %v20
  %218 = vmatprep.subr.mxu0 %v19
  %219 = vmatpush1.msra.mxu0 %v18
  %220 = vmatprep.subr.mxu0 %v17
  %221 = vmatpush1.msra.mxu0 %v16
  %222 = vmatprep.subr.mxu0 %v15
  %223 = vmatpush1.msra.mxu0 %v14
  %224 = vmatprep.subr.mxu0 0.0
  %225 = vmatpush2.msra.mxu0 0.0
  %226 = vmatprep.subr.mxu0 0.0
  %227 = vmatpush2.msra.mxu0 0.0
  %228 = vmatprep.subr.mxu0 0.0
  %229 = vmatpush2.msra.mxu0 0.0
  %230 = vmatprep.subr.mxu0 0.0
  %231 = vmatpush2.msra.mxu0 0.0
  %232 = vmatprep.subr.mxu0 0.0
  %233 = vmatpush2.msra.mxu0 0.0
  %234 = vmatprep.subr.mxu0 0.0
  %235 = vmatpush2.msra.mxu0 0.0
  %236 = vmatprep.subr.mxu0 0.0
  %237 = vmatpush2.msra.mxu0 0.0
  %238 = vmatprep.subr.mxu0 0.0
  %239 = vmatpush2.msra.mxu0 0.0
  %240 = vmatprep.subr.mxu0 0.0
  %241 = vmatpush2.msra.mxu0 0.0
  %242 = vmatprep.subr.mxu0 0.0
  %243 = vmatpush2.msra.mxu0 0.0
  %244 = vmatprep.subr.mxu0 0.0
  %245 = vmatpush2.msra.mxu0 0.0
  %246 = vmatprep.subr.mxu0 0.0
  %247 = vmatpush2.msra.mxu0 0.0
  %248 = vmatprep.subr.mxu0 0.0
  %249 = vmatpush2.msra.mxu0 0.0
  %250 = vmatprep.subr.mxu0 0.0
  %251 = vmatpush2.msra.mxu0 0.0
  %252 = vmatprep.subr.mxu0 0.0
  %253 = vmatpush2.msra.mxu0 0.0
  %254 = vmatprep.subr.mxu0 0.0
  %255 = vmatpush2.msra.mxu0 0.0
  %256 = vmatprep.mubr.f32.mxu0 0.0
  %257 = vmatmul.mubr.f32.gmra.mxu0 %v181
  %v258 = vpop.f32.mrf.mxu0
  %v259 = vadd.f32 %v157, %v258
  %v260 = vpop.f32.mrf.mxu0
  %v261 = vadd.f32 %v159, %v260
  %262 = vmatprep.mubr.f32.mxu0 0.0
  %263 = vmatmul.mubr.f32.gmra.mxu0 %v184
  %v264 = vpop.f32.mrf.mxu0
  %v265 = vadd.f32 %v163, %v264
  %v266 = vpop.f32.mrf.mxu0
  %v267 = vadd.f32 %v165, %v266
  %268 = vmatprep.mubr.f32.mxu0 0.0
  %269 = vmatmul.mubr.f32.gmra.mxu0 %v187
  %v270 = vpop.f32.mrf.mxu0
  %v271 = vadd.f32 %v169, %v270
  %v272 = vpop.f32.mrf.mxu0
  %v273 = vadd.f32 %v171, %v272
  %274 = vmatprep.mubr.f32.mxu0 0.0
  %275 = vmatmul.mubr.f32.gmra.mxu0 %v190
  %v276 = vpop.f32.mrf.mxu0
  %v277 = vadd.f32 %v175, %v276
  %v278 = vpop.f32.mrf.mxu0
  %v279 = vadd.f32 %v177, %v278
  %280 = vdwg.mxu0
  %v281 = vmax.f32 %v259, 0.0
  %v282 = vmax.f32 %v261, 0.0
  %v283 = vmax.f32 %v265, 0.0
  %v284 = vmax.f32 %v267, 0.0
  %v285 = vmax.f32 %v271, 0.0
  %v286 = vmax.f32 %v273, 0.0
  %v287 = vmax.f32 %v277, 0.0
  %v288 = vmax.f32 %v279, 0.0
  %289 = vst [vmem:[%s3] sm:$0xff] %v281
  %290 = vst [vmem:[%s3 + $0x8] sm:$0xff] %v282
  %291 = vst [vmem:[%s3 + $0x10] sm:$0xff] %v283
  %292 = vst [vmem:[%s3 + $0x18] sm:$0xff] %v284
  %293 = vst [vmem:[%s3 + $0x20] sm:$0xff] %v285
  %294 = vst [vmem:[%s3 + $0x28] sm:$0xff] %v286
  %295 = vst [vmem:[%s3 + $0x30] sm:$0xff] %v287
  %296 = vst [vmem:[%s3 + $0x38] sm:$0xff] %v288
  // Predicated region
  $region14: #{odeg_forward.1} parent=0 // pred_check
    _
  $region15: #{odeg_forward.1} parent=0 // pred_check_branch
    %298 = sbr.rel (0) target = $region17
  $region16: #{odeg_forward.1} parent=0 // pred_region
    _
  $region17: #{odeg_forward.1} parent=0 // pred_fallthru
    _
  // Predicated region
  $region18: #{odeg_forward.1} parent=0 // pred_check
    _
  $region19: #{odeg_forward.1} parent=0 // pred_check_branch
    %300 = sbr.rel (0) target = $region21
  $region20: #{odeg_forward.1} parent=0 // pred_region
    _
  $region21: #{odeg_forward.1} parent=0 // pred_fallthru
    _

</llo_original>
